<compile_context>
chip_gen: v7x
topology: tpu7x:2x2x1
jax: 0.10.0
libtpu: 0.0.40
codegen_flags: <defaults>
</compile_context>

<pallas_src>
import math

import jax
import jax.numpy as jnp
from jax.experimental import pallas as pl
from jax.experimental.pallas import tpu as pltpu


def netbf_kernel(x_ref, dx_ref, w1_ref, b1_ref, w2_ref, b2_ref, w3_ref, b3_ref,
                 o_ref):
    # Stack x/dx rows into the (2, B) bf16 RHS for the K=2 MXU contraction.
    d = jnp.concatenate([x_ref[...], dx_ref[...]], axis=0).astype(jnp.bfloat16)

    # Layer 1 on the MXU: (64, 2) @ (2, B), f32 accumulation.  Bias add stays
    # f32 on the VPU; tanh runs on bf16 data (2x EUP rate on v6e/v7x).
    a1 = jnp.dot(w1_ref[...], d, preferred_element_type=jnp.float32) + b1_ref[...]
    h1 = jnp.tanh(a1.astype(jnp.bfloat16))                       # (64, B) bf16

    # Layer 2 on the MXU: (32, 64) @ (64, B), bf16 operands, f32 accumulation.
    a2 = jnp.dot(w2_ref[...], h1, preferred_element_type=jnp.float32) + b2_ref[...]
    h2 = jnp.tanh(a2.astype(jnp.bfloat16))                       # (32, B) bf16

    # Layer 3: (1,32) . (32,B) as a sublane reduction (XLU) in f32; keeps the
    # output lane-dense so the store is a plain unmasked vst.
    y = jnp.sum(w3_ref[...] * h2.astype(jnp.float32), axis=0, keepdims=True)
    o_ref[...] = (y + b3_ref[...]).astype(o_ref.dtype)


def netbf_forward(x, dx, params, *, tile_b=32768):
    """x, dx: (N, 1) float32. Returns (N, 1) float32."""
    w1, b1, w2, b2, w3t, b3 = params
    n = x.shape[0]

    # Lane-dense batch tiling: shrink the tile for small N, pad N up to the tile.
    lanes = 128
    tile_b = max(lanes, min(tile_b, pl.cdiv(n, lanes) * lanes))
    n_pad = pl.cdiv(n, tile_b) * tile_b

    # (N,1) -> (1,N) is a free row-major view; pad each row only when needed
    # (half the wrapper-side HBM traffic of the old concat+pad).
    x2 = x.reshape(1, n)
    dx2 = dx.reshape(1, n)
    if n_pad != n:
        x2 = jnp.pad(x2, ((0, 0), (0, n_pad - n)))
        dx2 = jnp.pad(dx2, ((0, 0), (0, n_pad - n)))

    # bf16 MXU operands (tiny one-time casts); biases / W3 stay f32.
    w1b = w1.astype(jnp.bfloat16)
    w2b = w2.astype(jnp.bfloat16)

    const = lambda shape: pl.BlockSpec(shape, lambda i: (0, 0))   # VMEM-resident

    out = pl.pallas_call(
        netbf_kernel,
        out_shape=jax.ShapeDtypeStruct((1, n_pad), jnp.float32),
        grid=(n_pad // tile_b,),
        in_specs=[
            pl.BlockSpec((1, tile_b), lambda i: (0, i)),   # x row
            pl.BlockSpec((1, tile_b), lambda i: (0, i)),   # dx row
            const((64, 2)),     # W1 (bf16)
            const((64, 1)),     # b1
            const((32, 64)),    # W2 (bf16)
            const((32, 1)),     # b2
            const((32, 1)),     # W3^T
            const((1, 1)),      # b3
        ],
        out_specs=pl.BlockSpec((1, tile_b), lambda i: (0, i)),
        compiler_params=pltpu.CompilerParams(
            dimension_semantics=("parallel",),
            vmem_limit_bytes=48 * 1024 * 1024,
        ),
    )(x2, dx2, w1b, b1, w2b, b2, w3t, b3)

    return out[0, :n].reshape(n, 1)


def init_params(key):
    """torch-default Linear init; weights kept in torch (out, in) layout,
    biases as (out, 1) columns, W3 stored transposed as (32, 1)."""
    ks = jax.random.split(key, 6)

    def lin(kw, kb, fan_in, fan_out):
        bound = 1.0 / math.sqrt(fan_in)
        w = jax.random.uniform(kw, (fan_out, fan_in), jnp.float32, -bound, bound)
        b = jax.random.uniform(kb, (fan_out, 1), jnp.float32, -bound, bound)
        return w, b

    w1, b1 = lin(ks[0], ks[1], 2, 64)     # (64, 2), (64, 1)
    w2, b2 = lin(ks[2], ks[3], 64, 32)    # (32, 64), (32, 1)
    w3, b3 = lin(ks[4], ks[5], 32, 1)     # (1, 32), (1, 1)
    return (w1, b1, w2, b2, w3.T, b3)     # W3 stored as (32, 1)


def netbf_reference(x, dx, params):
    """Pure-JAX f32 reference matching the torch module's forward."""
    w1, b1, w2, b2, w3t, b3 = params
    d = jnp.concatenate([x, dx], axis=1)              # (N, 2)
    h1 = jnp.tanh(d @ w1.T + b1[:, 0])                # (N, 64)
    h2 = jnp.tanh(h1 @ w2.T + b2[:, 0])               # (N, 32)
    return h2 @ w3t + b3[:, 0]                        # (N, 1)


if __name__ == "__main__":
    key = jax.random.PRNGKey(0)
    kp, kx, kdx = jax.random.split(key, 3)

    params = init_params(kp)
    N = 200   # small, non-multiple of 128, exercises padding / tail handling
    x = jax.random.normal(kx, (N, 1), jnp.float32)
    dx = jax.random.normal(kdx, (N, 1), jnp.float32)

    netbf = jax.jit(netbf_forward)
    y = netbf(x, dx, params)
    jax.block_until_ready(y)

    y_ref = netbf_reference(x, dx, params)
    assert y.shape == (N, 1)
    # bf16 matmul operands / bf16 tanh intermediates -> relaxed tolerance
    # (f32 accumulation kept via preferred_element_type).
    assert jnp.allclose(y, y_ref, atol=5e-2, rtol=5e-2), float(
        jnp.max(jnp.abs(y - y_ref)))

    print("KERNEL_OK")
</pallas_src>

<mosaic_0001>
module attributes {stable_mosaic.version = 11 : i64} {
  func.func @netbf_kernel(%arg0: i32, %arg1: memref<1x256xf32, #tpu.memory_space<vmem>>, %arg2: memref<1x256xf32, #tpu.memory_space<vmem>>, %arg3: memref<64x2xbf16, #tpu.memory_space<vmem>>, %arg4: memref<64x1xf32, #tpu.memory_space<vmem>>, %arg5: memref<32x64xbf16, #tpu.memory_space<vmem>>, %arg6: memref<32x1xf32, #tpu.memory_space<vmem>>, %arg7: memref<32x1xf32, #tpu.memory_space<vmem>>, %arg8: memref<1x1xf32, #tpu.memory_space<vmem>>, %arg9: memref<1x256xf32, #tpu.memory_space<vmem>>) attributes {dimension_semantics = [#tpu.dimension_semantics<parallel>], iteration_bounds = array<i64: 1>, scalar_prefetch = 0 : i64, scratch_operands = 0 : i64, tpu.core_type = #tpu.core_type<tc>, window_params = [{transform_indices = @transform_0, window_bounds = array<i64: 1, 256>}, {transform_indices = @transform_1, window_bounds = array<i64: 1, 256>}, {pipeline_mode = #tpu.pipeline_mode<synchronous>, transform_indices = @transform_2, window_bounds = array<i64: 64, 2>}, {pipeline_mode = #tpu.pipeline_mode<synchronous>, transform_indices = @transform_3, window_bounds = array<i64: 64, 1>}, {pipeline_mode = #tpu.pipeline_mode<synchronous>, transform_indices = @transform_4, window_bounds = array<i64: 32, 64>}, {pipeline_mode = #tpu.pipeline_mode<synchronous>, transform_indices = @transform_5, window_bounds = array<i64: 32, 1>}, {pipeline_mode = #tpu.pipeline_mode<synchronous>, transform_indices = @transform_6, window_bounds = array<i64: 32, 1>}, {pipeline_mode = #tpu.pipeline_mode<synchronous>, transform_indices = @transform_7, window_bounds = array<i64: 1, 1>}, {transform_indices = @transform_8, window_bounds = array<i64: 1, 256>}]} {
    %c0 = arith.constant 0 : index
    %c0_0 = arith.constant 0 : index
    %0 = vector.load %arg1[%c0, %c0_0] : memref<1x256xf32, #tpu.memory_space<vmem>>, vector<1x256xf32>
    %c0_1 = arith.constant 0 : index
    %c0_2 = arith.constant 0 : index
    %1 = vector.load %arg2[%c0_1, %c0_2] : memref<1x256xf32, #tpu.memory_space<vmem>>, vector<1x256xf32>
    %2 = tpu.concatenate %0, %1 in 0 : vector<1x256xf32>, vector<1x256xf32> -> vector<2x256xf32>
    %3 = arith.truncf %2 : vector<2x256xf32> to vector<2x256xbf16>
    %c0_3 = arith.constant 0 : index
    %c0_4 = arith.constant 0 : index
    %4 = vector.load %arg3[%c0_3, %c0_4] : memref<64x2xbf16, #tpu.memory_space<vmem>>, vector<64x2xbf16>
    %cst = arith.constant dense<0.000000e+00> : vector<64x256xf32>
    %5 = tpu.matmul %4, %3, %cst {dimension_numbers = #tpu.dot_dimension_numbers<[1], [0], [0], [1], [0, 0, 1, 1], [], []>} : vector<64x2xbf16>, vector<2x256xbf16>, vector<64x256xf32> -> vector<64x256xf32>
    %c0_5 = arith.constant 0 : index
    %c0_6 = arith.constant 0 : index
    %6 = vector.load %arg4[%c0_5, %c0_6] : memref<64x1xf32, #tpu.memory_space<vmem>>, vector<64x1xf32>
    %7 = vector.broadcast %6 : vector<64x1xf32> to vector<64x256xf32>
    %8 = arith.addf %5, %7 : vector<64x256xf32>
    %9 = arith.truncf %8 : vector<64x256xf32> to vector<64x256xbf16>
    %10 = math.tanh %9 : vector<64x256xbf16>
    %c0_7 = arith.constant 0 : index
    %c0_8 = arith.constant 0 : index
    %11 = vector.load %arg5[%c0_7, %c0_8] : memref<32x64xbf16, #tpu.memory_space<vmem>>, vector<32x64xbf16>
    %cst_9 = arith.constant dense<0.000000e+00> : vector<32x256xf32>
    %12 = tpu.matmul %11, %10, %cst_9 {dimension_numbers = #tpu.dot_dimension_numbers<[1], [0], [0], [1], [0, 0, 1, 1], [], []>} : vector<32x64xbf16>, vector<64x256xbf16>, vector<32x256xf32> -> vector<32x256xf32>
    %c0_10 = arith.constant 0 : index
    %c0_11 = arith.constant 0 : index
    %13 = vector.load %arg6[%c0_10, %c0_11] : memref<32x1xf32, #tpu.memory_space<vmem>>, vector<32x1xf32>
    %14 = vector.broadcast %13 : vector<32x1xf32> to vector<32x256xf32>
    %15 = arith.addf %12, %14 : vector<32x256xf32>
    %16 = arith.truncf %15 : vector<32x256xf32> to vector<32x256xbf16>
    %17 = math.tanh %16 : vector<32x256xbf16>
    %c0_12 = arith.constant 0 : index
    %c0_13 = arith.constant 0 : index
    %18 = vector.load %arg7[%c0_12, %c0_13] : memref<32x1xf32, #tpu.memory_space<vmem>>, vector<32x1xf32>
    %19 = arith.extf %17 : vector<32x256xbf16> to vector<32x256xf32>
    %20 = vector.broadcast %18 : vector<32x1xf32> to vector<32x256xf32>
    %21 = arith.mulf %20, %19 : vector<32x256xf32>
    %cst_14 = arith.constant dense<0.000000e+00> : vector<256xf32>
    %22 = vector.multi_reduction <add>, %21, %cst_14 [0] : vector<32x256xf32> to vector<256xf32>
    %23 = vector.shape_cast %22 : vector<256xf32> to vector<1x256xf32>
    %c0_15 = arith.constant 0 : index
    %c0_16 = arith.constant 0 : index
    %24 = vector.load %arg8[%c0_15, %c0_16] : memref<1x1xf32, #tpu.memory_space<vmem>>, vector<1x1xf32>
    %25 = vector.broadcast %24 : vector<1x1xf32> to vector<1x256xf32>
    %26 = arith.addf %23, %25 : vector<1x256xf32>
    %c0_17 = arith.constant 0 : index
    %c0_18 = arith.constant 0 : index
    %27 = vector.load %arg9[%c0_17, %c0_18] : memref<1x256xf32, #tpu.memory_space<vmem>>, vector<1x256xf32>
    tpu.vector_store %arg9[%c0_17, %c0_18], %26 {strides = array<i32>} : memref<1x256xf32, #tpu.memory_space<vmem>>, vector<1x256xf32>,
    return
  }
  func.func @transform_0(%arg0: i32) -> (i32, i32) {
    %c0_i32 = arith.constant 0 : i32
    %c0_i32_0 = arith.constant 0 : i32
    return %c0_i32, %arg0 : i32, i32
  }
  func.func @transform_1(%arg0: i32) -> (i32, i32) {
    %c0_i32 = arith.constant 0 : i32
    %c0_i32_0 = arith.constant 0 : i32
    return %c0_i32, %arg0 : i32, i32
  }
  func.func @transform_2(%arg0: i32) -> (i32, i32) {
    %c0_i32 = arith.constant 0 : i32
    %c0_i32_0 = arith.constant 0 : i32
    %c0_i32_1 = arith.constant 0 : i32
    return %c0_i32, %c0_i32_0 : i32, i32
  }
  func.func @transform_3(%arg0: i32) -> (i32, i32) {
    %c0_i32 = arith.constant 0 : i32
    %c0_i32_0 = arith.constant 0 : i32
    %c0_i32_1 = arith.constant 0 : i32
    return %c0_i32, %c0_i32_0 : i32, i32
  }
  func.func @transform_4(%arg0: i32) -> (i32, i32) {
    %c0_i32 = arith.constant 0 : i32
    %c0_i32_0 = arith.constant 0 : i32
    %c0_i32_1 = arith.constant 0 : i32
    return %c0_i32, %c0_i32_0 : i32, i32
  }
  func.func @transform_5(%arg0: i32) -> (i32, i32) {
    %c0_i32 = arith.constant 0 : i32
    %c0_i32_0 = arith.constant 0 : i32
    %c0_i32_1 = arith.constant 0 : i32
    return %c0_i32, %c0_i32_0 : i32, i32
  }
  func.func @transform_6(%arg0: i32) -> (i32, i32) {
    %c0_i32 = arith.constant 0 : i32
    %c0_i32_0 = arith.constant 0 : i32
    %c0_i32_1 = arith.constant 0 : i32
    return %c0_i32, %c0_i32_0 : i32, i32
  }
  func.func @transform_7(%arg0: i32) -> (i32, i32) {
    %c0_i32 = arith.constant 0 : i32
    %c0_i32_0 = arith.constant 0 : i32
    %c0_i32_1 = arith.constant 0 : i32
    return %c0_i32, %c0_i32_0 : i32, i32
  }
  func.func @transform_8(%arg0: i32) -> (i32, i32) {
    %c0_i32 = arith.constant 0 : i32
    %c0_i32_0 = arith.constant 0 : i32
    return %c0_i32, %arg0 : i32, i32
  }
}

</mosaic_0001>

<llo_original>
// kernel: netbf_forward.1
$region0: #{netbf_forward.1}
  #allocation0 [shape = 'u32[]', space=smem, size = 0x4, offset = 0x4, fixed_abs, tag = 'smem constant byte address 0x4 - core index']
  #allocation1 [shape = 'u32[144,128]{1,0:T(1,128)}', space=vmem, size = 0x12000, scoped, tag = 'internal scratch']
  #allocation2 [shape = 'f32[1,1]{1,0:T(1,128)S(1)}', space=vmem, size = 0x200, scoped, tag = 'scoped memory for netbf_forward.1']
  %s0 = inlined_call_operand.vmem [shape: f32[1,256], index: 0, kind: input, shape index: {}]
  %s1 = inlined_call_operand.vmem [shape: f32[1,256], index: 1, kind: input, shape index: {}]
  %s2 = inlined_call_operand.vmem [shape: bf16[64,2], index: 2, kind: input, shape index: {}]
  %s3 = inlined_call_operand.vmem [shape: f32[64,1], index: 3, kind: input, shape index: {}]
  %s4 = inlined_call_operand.vmem [shape: bf16[32,64], index: 4, kind: input, shape index: {}]
  %s5 = inlined_call_operand.vmem [shape: f32[32,1], index: 5, kind: input, shape index: {}]
  %s6 = inlined_call_operand.vmem [shape: f32[32,1], index: 6, kind: input, shape index: {}]
  %s7 = inlined_call_operand.<no memory space> [shape: f32[1,1], index: 7, kind: input, shape index: {}]
  %s8 = inlined_call_operand.vmem [shape: f32[1,256], index: 8, kind: output, shape index: {}]
  %s9 = sld [smem:[#allocation0]]
  $region42: #{netbf_forward.1} parent=0
    _
  %s11 = ssub.s32 1, %s9
  %s12 = scalar_select 0, %s11, %s9
  %v13 = vstv %s7
  %14 = vst [vmem:[#allocation2] sm:$0x1] %v13
  // Predicated region
  $region2: #{netbf_forward.1} parent=0 // pred_check
    _
  $region3: #{netbf_forward.1} parent=0 // pred_check_branch
    %16 = sbr.rel (0) target = $region5
  $region4: #{netbf_forward.1} parent=0 // pred_region
    _
  $region5: #{netbf_forward.1} parent=0 // pred_fallthru
    _
  // Predicated region
  $region6: #{netbf_forward.1} parent=0 // pred_check
    _
  $region7: #{netbf_forward.1} parent=0 // pred_check_branch
    %18 = sbr.rel (0) target = $region9
  $region8: #{netbf_forward.1} parent=0 // pred_region
    _
  $region9: #{netbf_forward.1} parent=0 // pred_fallthru
    _
  // Predicated region
  $region10: #{netbf_forward.1} parent=0 // pred_check
    _
  $region11: #{netbf_forward.1} parent=0 // pred_check_branch
    %20 = sbr.rel (0) target = $region13
  $region12: #{netbf_forward.1} parent=0 // pred_region
    _
  $region13: #{netbf_forward.1} parent=0 // pred_fallthru
    _
  // Predicated region
  $region14: #{netbf_forward.1} parent=0 // pred_check
    _
  $region15: #{netbf_forward.1} parent=0 // pred_check_branch
    %22 = sbr.rel (0) target = $region17
  $region16: #{netbf_forward.1} parent=0 // pred_region
    _
  $region17: #{netbf_forward.1} parent=0 // pred_fallthru
    _
  // Predicated region
  $region18: #{netbf_forward.1} parent=0 // pred_check
    _
  $region19: #{netbf_forward.1} parent=0 // pred_check_branch
    %24 = sbr.rel (0) target = $region21
  $region20: #{netbf_forward.1} parent=0 // pred_region
    _
  $region21: #{netbf_forward.1} parent=0 // pred_fallthru
    _
  // Predicated region
  $region22: #{netbf_forward.1} parent=0 // pred_check
    _
  $region23: #{netbf_forward.1} parent=0 // pred_check_branch
    %26 = sbr.rel (0) target = $region25
  $region24: #{netbf_forward.1} parent=0 // pred_region
    _
  $region25: #{netbf_forward.1} parent=0 // pred_fallthru
    _
  // Predicated region
  $region26: #{netbf_forward.1} parent=0 // pred_check
    _
  $region27: #{netbf_forward.1} parent=0 // pred_check_branch
    %28 = sbr.rel (0) target = $region29
  $region28: #{netbf_forward.1} parent=0 // pred_region
    _
  $region29: #{netbf_forward.1} parent=0 // pred_fallthru
    _
  // Predicated region
  $region30: #{netbf_forward.1} parent=0 // pred_check
    _
  $region31: #{netbf_forward.1} parent=0 // pred_check_branch
    %30 = sbr.rel (0) target = $region33
  $region32: #{netbf_forward.1} parent=0 // pred_region
    _
  $region33: #{netbf_forward.1} parent=0 // pred_fallthru
    _
  %v32 = vld [vmem:[%s0] sm:$0x3]
  %v33 = vld [vmem:[%s1] sm:$0x3]
  %v35 = vlaneseq
  %v36 = vshrl.u32 %v35, 7
  %v37 = vsub.s32 0, %v36
  %v38 = vrot.slane %v32, %v37
  %v39 = vlaneseq
  %v40 = vshrl.u32 %v39, 7
  %v41 = vsub.s32 1, %v40
  %v42 = vrot.slane %v32, %v41
  %v46 = vlaneseq
  %v47 = vshrl.u32 %v46, 7
  %v48 = vsub.s32 0, %v47
  %v49 = vrot.slane %v33, %v48
  %v50 = vlaneseq
  %v51 = vshrl.u32 %v50, 7
  %v52 = vsub.s32 1, %v51
  %v53 = vrot.slane %v33, %v52
  %vm56 = vcmask 1040384
  %v57 = vsel %vm56, %v38, %v49
  %v58 = vsel %vm56, %v42, %v53
  %v59 = vpack.c.bf16 %v57, %v57
  %v60 = vpack.c.bf16 %v58, %v58
  %v61 = vld [vmem:[%s2] sm:$0xf]
  %v62 = vld [vmem:[%s2 + $0x4] sm:$0xf]
  %v63 = vld [vmem:[%s2 + $0x8] sm:$0xf]
  %v64 = vld [vmem:[%s2 + $0xc] sm:$0xf]
  %v65 = vld [vmem:[%s2 + $0x10] sm:$0xf]
  %v66 = vld [vmem:[%s2 + $0x14] sm:$0xf]
  %v67 = vld [vmem:[%s2 + $0x18] sm:$0xf]
  %v68 = vld [vmem:[%s2 + $0x1c] sm:$0xf]
  %v69 = vld [vmem:[%s3] sm:$0xff]
  %v70 = vld [vmem:[%s3 + $0x8] sm:$0xff]
  %v71 = vld [vmem:[%s3 + $0x10] sm:$0xff]
  %v72 = vld [vmem:[%s3 + $0x18] sm:$0xff]
  %v73 = vld [vmem:[%s3 + $0x20] sm:$0xff]
  %v74 = vld [vmem:[%s3 + $0x28] sm:$0xff]
  %v75 = vld [vmem:[%s3 + $0x30] sm:$0xff]
  %v76 = vld [vmem:[%s3 + $0x38] sm:$0xff]
  %78 = vset.pattern.permute.xlu0 0
  %79 = vperm.xlu0 %78, %v69
  %v80 = vpop.permute.xlu0 %79
  %83 = vset.pattern.permute.xlu0 0
  %84 = vperm.xlu0 %83, %v70
  %v85 = vpop.permute.xlu0 %84
  %88 = vset.pattern.permute.xlu0 0
  %89 = vperm.xlu0 %88, %v71
  %v90 = vpop.permute.xlu0 %89
  %93 = vset.pattern.permute.xlu0 0
  %94 = vperm.xlu0 %93, %v72
  %v95 = vpop.permute.xlu0 %94
  %98 = vset.pattern.permute.xlu0 0
  %99 = vperm.xlu0 %98, %v73
  %v100 = vpop.permute.xlu0 %99
  %103 = vset.pattern.permute.xlu0 0
  %104 = vperm.xlu0 %103, %v74
  %v105 = vpop.permute.xlu0 %104
  %108 = vset.pattern.permute.xlu0 0
  %109 = vperm.xlu0 %108, %v75
  %v110 = vpop.permute.xlu0 %109
  %113 = vset.pattern.permute.xlu0 0
  %114 = vperm.xlu0 %113, %v76
  %v115 = vpop.permute.xlu0 %114
  %v125 = vunpack.c.l.b16 %v61
  %v126 = vunpack.c.l.b16 %v62
  %v127 = vunpack.c.l.b16 %v63
  %v128 = vunpack.c.l.b16 %v64
  %v129 = vunpack.c.l.b16 %v65
  %v130 = vunpack.c.l.b16 %v66
  %v131 = vunpack.c.l.b16 %v67
  %v132 = vunpack.c.l.b16 %v68
  %v133 = vpack.c.b16 %v126, %v125
  %v134 = vpack.c.b16 %v128, %v127
  %v135 = vpack.c.b16 %v130, %v129
  %v136 = vpack.c.b16 %v132, %v131
  %vm137 = vcmask 15360
  %v139 = vsel %vm137, %v133, 0
  %v142 = vsel %vm137, %v134, 0
  %v145 = vsel %vm137, %v135, 0
  %v148 = vsel %vm137, %v136, 0
  %v151 = vsel %vm56, %v59, 0
  %v154 = vsel %vm56, %v60, 0
  %156 = vmatprep.subr.bf16.mxu0 %v154
  %157 = vmatpush1.bf16.msra.mxu0 %v151
  %158 = vmatprep.subr.bf16.mxu0 0
  %159 = vmatpush1.bf16.msra.mxu0 0
  %160 = vmatprep.subr.bf16.mxu0 0
  %161 = vmatpush1.bf16.msra.mxu0 0
  %162 = vmatprep.subr.bf16.mxu0 0
  %163 = vmatpush1.bf16.msra.mxu0 0
  %164 = vmatprep.subr.bf16.mxu0 0
  %165 = vmatpush1.bf16.msra.mxu0 0
  %166 = vmatprep.subr.bf16.mxu0 0
  %167 = vmatpush1.bf16.msra.mxu0 0
  %168 = vmatprep.subr.bf16.mxu0 0
  %169 = vmatpush1.bf16.msra.mxu0 0
  %170 = vmatprep.subr.bf16.mxu0 0
  %171 = vmatpush1.bf16.msra.mxu0 0
  %172 = vmatprep.subr.bf16.mxu0 0
  %173 = vmatpush1.bf16.msra.mxu0 0
  %174 = vmatprep.subr.bf16.mxu0 0
  %175 = vmatpush1.bf16.msra.mxu0 0
  %176 = vmatprep.subr.bf16.mxu0 0
  %177 = vmatpush1.bf16.msra.mxu0 0
  %178 = vmatprep.subr.bf16.mxu0 0
  %179 = vmatpush1.bf16.msra.mxu0 0
  %180 = vmatprep.subr.bf16.mxu0 0
  %181 = vmatpush1.bf16.msra.mxu0 0
  %182 = vmatprep.subr.bf16.mxu0 0
  %183 = vmatpush1.bf16.msra.mxu0 0
  %184 = vmatprep.subr.bf16.mxu0 0
  %185 = vmatpush1.bf16.msra.mxu0 0
  %186 = vmatprep.subr.bf16.mxu0 0
  %187 = vmatpush1.bf16.msra.mxu0 0
  %188 = vmatprep.mubr.bf16.mxu0 0
  %189 = vmatmul.mubr.bf16.gmra.mrb[0].mxu0 %v139
  %v190 = vpop.f32.mrb[0].mxu0
  %v191 = vadd.f32 %v80, %v190
  %v192 = vpop.f32.mrb[0].mxu0
  %v193 = vadd.f32 %v80, %v192
  %v194 = vpop.f32.mrb[0].mxu0
  %v195 = vadd.f32 %v85, %v194
  %v196 = vpop.f32.mrb[0].mxu0
  %v197 = vadd.f32 %v85, %v196
  %198 = vmatprep.mubr.bf16.mxu0 0
  %199 = vmatmul.mubr.bf16.gmra.mrb[0].mxu0 %v142
  %v200 = vpop.f32.mrb[0].mxu0
  %v201 = vadd.f32 %v90, %v200
  %v202 = vpop.f32.mrb[0].mxu0
  %v203 = vadd.f32 %v90, %v202
  %v204 = vpop.f32.mrb[0].mxu0
  %v205 = vadd.f32 %v95, %v204
  %v206 = vpop.f32.mrb[0].mxu0
  %v207 = vadd.f32 %v95, %v206
  %208 = vmatprep.mubr.bf16.mxu0 0
  %209 = vmatmul.mubr.bf16.gmra.mrb[0].mxu0 %v145
  %v210 = vpop.f32.mrb[0].mxu0
  %v211 = vadd.f32 %v100, %v210
  %v212 = vpop.f32.mrb[0].mxu0
  %v213 = vadd.f32 %v100, %v212
  %v214 = vpop.f32.mrb[0].mxu0
  %v215 = vadd.f32 %v105, %v214
  %v216 = vpop.f32.mrb[0].mxu0
  %v217 = vadd.f32 %v105, %v216
  %218 = vmatprep.mubr.bf16.mxu0 0
  %219 = vmatmul.mubr.bf16.gmra.mrb[0].mxu0 %v148
  %v220 = vpop.f32.mrb[0].mxu0
  %v221 = vadd.f32 %v110, %v220
  %v222 = vpop.f32.mrb[0].mxu0
  %v223 = vadd.f32 %v110, %v222
  %v224 = vpop.f32.mrb[0].mxu0
  %v225 = vadd.f32 %v115, %v224
  %v226 = vpop.f32.mrb[0].mxu0
  %v227 = vadd.f32 %v115, %v226
  %228 = vdwg.mxu0
  %v229 = vpack.c.bf16 %v195, %v191
  %v230 = vpack.c.bf16 %v197, %v193
  %v231 = vpack.c.bf16 %v205, %v201
  %v232 = vpack.c.bf16 %v207, %v203
  %v233 = vpack.c.bf16 %v215, %v211
  %v234 = vpack.c.bf16 %v217, %v213
  %v235 = vpack.c.bf16 %v225, %v221
  %v236 = vpack.c.bf16 %v227, %v223
  %v237 = vtanh.bf16.pop %v229
  %v238 = vtanh.bf16.pop %v230
  %v239 = vtanh.bf16.pop %v231
  %v240 = vtanh.bf16.pop %v232
  %v241 = vtanh.bf16.pop %v233
  %v242 = vtanh.bf16.pop %v234
  %v243 = vtanh.bf16.pop %v235
  %v244 = vtanh.bf16.pop %v236
  %v245 = vld [vmem:[%s4] sm:$0xf]
  %v246 = vld [vmem:[%s4 + $0x4] sm:$0xf]
  %v247 = vld [vmem:[%s4 + $0x8] sm:$0xf]
  %v248 = vld [vmem:[%s4 + $0xc] sm:$0xf]
  %v249 = vld [vmem:[%s5] sm:$0xff]
  %v250 = vld [vmem:[%s5 + $0x8] sm:$0xff]
  %v251 = vld [vmem:[%s5 + $0x10] sm:$0xff]
  %v252 = vld [vmem:[%s5 + $0x18] sm:$0xff]
  %254 = vset.pattern.permute.xlu0 0
  %255 = vperm.xlu0 %254, %v249
  %v256 = vpop.permute.xlu0 %255
  %259 = vset.pattern.permute.xlu0 0
  %260 = vperm.xlu0 %259, %v250
  %v261 = vpop.permute.xlu0 %260
  %264 = vset.pattern.permute.xlu0 0
  %265 = vperm.xlu0 %264, %v251
  %v266 = vpop.permute.xlu0 %265
  %269 = vset.pattern.permute.xlu0 0
  %270 = vperm.xlu0 %269, %v252
  %v271 = vpop.permute.xlu0 %270
  %v277 = vunpack.c.l.b16 %v245
  %v278 = vunpack.c.l.b16 %v246
  %v279 = vunpack.c.l.b16 %v247
  %v280 = vunpack.c.l.b16 %v248
  %v281 = vpack.c.b16 %v278, %v277
  %v282 = vpack.c.b16 %v280, %v279
  %vm283 = vcmask 523264
  %v285 = vsel %vm283, %v281, 0
  %v288 = vsel %vm283, %v282, 0
  %290 = vmatprep.subr.bf16.mxu0 %v238
  %291 = vmatpush1.bf16.msra.mxu0 %v237
  %292 = vmatprep.subr.bf16.mxu0 %v240
  %293 = vmatpush1.bf16.msra.mxu0 %v239
  %294 = vmatprep.subr.bf16.mxu0 %v242
  %295 = vmatpush1.bf16.msra.mxu0 %v241
  %296 = vmatprep.subr.bf16.mxu0 %v244
  %297 = vmatpush1.bf16.msra.mxu0 %v243
  %298 = vmatprep.subr.bf16.mxu0 0
  %299 = vmatpush1.bf16.msra.mxu0 0
  %300 = vmatprep.subr.bf16.mxu0 0
  %301 = vmatpush1.bf16.msra.mxu0 0
  %302 = vmatprep.subr.bf16.mxu0 0
  %303 = vmatpush1.bf16.msra.mxu0 0
  %304 = vmatprep.subr.bf16.mxu0 0
  %305 = vmatpush1.bf16.msra.mxu0 0
  %306 = vmatprep.subr.bf16.mxu0 0
  %307 = vmatpush1.bf16.msra.mxu0 0
  %308 = vmatprep.subr.bf16.mxu0 0
  %309 = vmatpush1.bf16.msra.mxu0 0
  %310 = vmatprep.subr.bf16.mxu0 0
  %311 = vmatpush1.bf16.msra.mxu0 0
  %312 = vmatprep.subr.bf16.mxu0 0
  %313 = vmatpush1.bf16.msra.mxu0 0
  %314 = vmatprep.subr.bf16.mxu0 0
  %315 = vmatpush1.bf16.msra.mxu0 0
  %316 = vmatprep.subr.bf16.mxu0 0
  %317 = vmatpush1.bf16.msra.mxu0 0
  %318 = vmatprep.subr.bf16.mxu0 0
  %319 = vmatpush1.bf16.msra.mxu0 0
  %320 = vmatprep.subr.bf16.mxu0 0
  %321 = vmatpush1.bf16.msra.mxu0 0
  %322 = vmatprep.mubr.bf16.mxu0 0
  %323 = vmatmul.mubr.bf16.gmra.mrb[0].mxu0 %v285
  %v324 = vpop.f32.mrb[0].mxu0
  %v325 = vadd.f32 %v256, %v324
  %v326 = vpop.f32.mrb[0].mxu0
  %v327 = vadd.f32 %v256, %v326
  %v328 = vpop.f32.mrb[0].mxu0
  %v329 = vadd.f32 %v261, %v328
  %v330 = vpop.f32.mrb[0].mxu0
  %v331 = vadd.f32 %v261, %v330
  %332 = vmatprep.mubr.bf16.mxu0 0
  %333 = vmatmul.mubr.bf16.gmra.mrb[0].mxu0 %v288
  %v334 = vpop.f32.mrb[0].mxu0
  %v335 = vadd.f32 %v266, %v334
  %v336 = vpop.f32.mrb[0].mxu0
  %v337 = vadd.f32 %v266, %v336
  %v338 = vpop.f32.mrb[0].mxu0
  %v339 = vadd.f32 %v271, %v338
  %v340 = vpop.f32.mrb[0].mxu0
  %v341 = vadd.f32 %v271, %v340
  %342 = vdwg.mxu0
  %v343 = vpack.c.bf16 %v329, %v325
  %v344 = vpack.c.bf16 %v331, %v327
  %v345 = vpack.c.bf16 %v339, %v335
  %v346 = vpack.c.bf16 %v341, %v337
  %v347 = vtanh.bf16.pop %v343
  %v348 = vtanh.bf16.pop %v344
  %v349 = vtanh.bf16.pop %v345
  %v350 = vtanh.bf16.pop %v346
  %v351 = vld [vmem:[%s6] sm:$0xff]
  %v352 = vld [vmem:[%s6 + $0x8] sm:$0xff]
  %v353 = vld [vmem:[%s6 + $0x10] sm:$0xff]
  %v354 = vld [vmem:[%s6 + $0x18] sm:$0xff]
  %v355 = vunpack.c.l.bf16 %v347
  %v356 = vunpack.c.l.bf16 %v348
  %v357 = vunpack.c.h.bf16 %v347
  %v358 = vunpack.c.h.bf16 %v348
  %v359 = vunpack.c.l.bf16 %v349
  %v360 = vunpack.c.l.bf16 %v350
  %v361 = vunpack.c.h.bf16 %v349
  %v362 = vunpack.c.h.bf16 %v350
  %364 = vset.pattern.permute.xlu0 0
  %365 = vperm.xlu0 %364, %v351
  %v366 = vpop.permute.xlu0 %365
  %369 = vset.pattern.permute.xlu0 0
  %370 = vperm.xlu0 %369, %v352
  %v371 = vpop.permute.xlu0 %370
  %374 = vset.pattern.permute.xlu0 0
  %375 = vperm.xlu0 %374, %v353
  %v376 = vpop.permute.xlu0 %375
  %379 = vset.pattern.permute.xlu0 0
  %380 = vperm.xlu0 %379, %v354
  %v381 = vpop.permute.xlu0 %380
  %v383 = vmul.f32 %v366, %v355
  %v384 = vmul.f32 %v366, %v356
  %v385 = vmul.f32 %v371, %v357
  %v386 = vmul.f32 %v371, %v358
  %v387 = vmul.f32 %v376, %v359
  %v388 = vmul.f32 %v376, %v360
  %v389 = vmul.f32 %v381, %v361
  %v390 = vmul.f32 %v381, %v362
  %v391 = vadd.f32 %v383, %v385
  %v392 = vadd.f32 %v391, %v387
  %v393 = vadd.f32 %v392, %v389
  %v394 = vrot.slane %v393, 4
  %v395 = vadd.f32 %v393, %v394
  %v396 = vrot.slane %v395, 2
  %v397 = vadd.f32 %v395, %v396
  %v398 = vrot.slane %v397, 1
  %v399 = vadd.f32 %v397, %v398
  %v400 = vadd.f32 %v384, %v386
  %v401 = vadd.f32 %v400, %v388
  %v402 = vadd.f32 %v401, %v390
  %v403 = vrot.slane %v402, 4
  %v404 = vadd.f32 %v402, %v403
  %v405 = vrot.slane %v404, 2
  %v406 = vadd.f32 %v404, %v405
  %v407 = vrot.slane %v406, 1
  %v408 = vadd.f32 %v406, %v407
  %v409 = vld [vmem:[#allocation2] sm:$0x1]
  %411 = vset.pattern.permute.xlu0 0
  %412 = vperm.xlu0 %411, %v409
  %v413 = vpop.permute.xlu0 %412
  %v415 = vlaneseq
  %v416 = vshrl.u32 %v415, 7
  %v417 = vsub.s32 0, %v416
  %v418 = vrot.slane %v413, %v417
  %v419 = vadd.f32 %v399, %v418
  %v420 = vadd.f32 %v408, %v418
  %v423 = vcombine.low %v419, %v420
  %v425 = vunpack.c.l.s4 1966171168
  %v426 = vunpack.c.0.s8 %v425
  %v427 = vlaneseq
  %v428 = vshrl.u32 %v427, 7
  %v429 = vsub.s32 %v426, %v428
  %v430 = vrot.slane %v423, %v429
  %v432 = vunpack.c.l.s4 1966171168
  %v433 = vunpack.c.0.s8 %v432
  %v434 = vlaneseq
  %v435 = vshrl.u32 %v434, 7
  %v436 = vsub.s32 %v433, %v435
  %v437 = vrot.slane %v430, %v436
  %v439 = vlaneseq
  %vm440 = vcmp.ge.s32.totalorder %v439, 0
  %vm441 = vcmp.lt.s32.totalorder %v439, 256
  %vm442 = vmand %vm440, %vm441
  %443 = vst.msk [vmem:[%s8] sm:$0x3] %vm442, %v437
  // Predicated region
  $region34: #{netbf_forward.1} parent=0 // pred_check
    _
  $region35: #{netbf_forward.1} parent=0 // pred_check_branch
    %445 = sbr.rel (0) target = $region37
  $region36: #{netbf_forward.1} parent=0 // pred_region
    _
  $region37: #{netbf_forward.1} parent=0 // pred_fallthru
    _
  // Predicated region
  $region38: #{netbf_forward.1} parent=0 // pred_check
    _
  $region39: #{netbf_forward.1} parent=0 // pred_check_branch
    %447 = sbr.rel (0) target = $region41
  $region40: #{netbf_forward.1} parent=0 // pred_region
    _
  $region41: #{netbf_forward.1} parent=0 // pred_fallthru
    _

</llo_original>
